<compile_context>
chip_gen: v7x
topology: tpu7x:2x2x1
jax: 0.10.0
libtpu: 0.0.40
codegen_flags: <defaults>
</compile_context>

<pallas_src>
import functools

import jax
import jax.numpy as jnp
from jax.experimental import pallas as pl
from jax.experimental.pallas import tpu as pltpu


# ----------------------------- kernel -----------------------------
def _prompt_kernel(bias_ref, base_ref, out_ref, *, n_ctx, prefix_len):
    # grid = (class_tiles, B); batch is the inner (fast) axis so the base tile
    # is fetched once per class tile and reused for every batch element.
    b = pl.program_id(1)

    bias_b = bias_ref[pl.ds(b, 1), :]                       # (1, ctx_dim), f32
    _, seq_len, ctx_dim = base_ref.shape
    row = jax.lax.broadcasted_iota(jnp.int32, (seq_len, ctx_dim), 0)
    on_ctx_rows = (row >= prefix_len) & (row < prefix_len + n_ctx)
    add = jnp.where(on_ctx_rows, bias_b, 0.0)               # (seq_len, ctx_dim)

    # prompts[b, c] = [prefix | ctx + bias_b | suffix]
    #              = base[c] (= [prefix | ctx | suffix]) + bias_b on ctx rows.
    # Single dense full-tile store; f32 math in registers, cast at the store.
    out_ref[0] = (base_ref[...].astype(jnp.float32)
                  + add[None, :, :]).astype(out_ref.dtype)


def _pick_class_tile(n_cls, seq_len, ctx_dim, itemsize,
                     budget_bytes=6 * 1024 * 1024):
    """Class tile sized against a ~6 MiB block budget (no divisibility needed)."""
    per_class = max(1, seq_len * ctx_dim * itemsize)
    c = max(1, min(n_cls, budget_bytes // per_class))
    # v7x megacore: keep >= 2 class tiles so the "parallel" axis can shard
    # across both TensorCores (cheap on single-TC v5e/v6e: one extra step).
    if n_cls >= 2:
        c = min(c, -(-n_cls // 2))
    return int(c)


# ----------------------------- wrapper -----------------------------
def prompt_learner_forward(image_features, params, *, class_tile=None,
                           out_dtype=None,
                           vmem_limit_bytes=48 * 1024 * 1024):
    B, T, vis_dim = image_features.shape
    ctx = params["ctx"]
    n_ctx, ctx_dim = ctx.shape
    prefix = params["token_prefix"]                 # (n_cls, prefix_len, ctx_dim)
    suffix = params["token_suffix"]                 # (n_cls, n_suf, ctx_dim)
    n_cls, prefix_len = prefix.shape[0], prefix.shape[1]
    seq_len = prefix_len + n_ctx + suffix.shape[1]
    if out_dtype is None:
        # Matches the module (embedding dtype).  Pass jnp.bfloat16 to halve
        # HBM write bytes (~2x wall-clock) if the downstream text encoder
        # accepts bf16 prompts.
        out_dtype = prefix.dtype

    # --- meta-net MLP hoisted to plain JAX (tiny, off the HBM-write path) ---
    # f32 accumulation even if image_features arrives as bf16.
    x = jnp.mean(image_features.astype(jnp.float32), axis=1)          # (B, vis)
    h = jnp.maximum(x @ params["w1"].astype(jnp.float32)
                    + params["b1"].astype(jnp.float32), 0.0)           # (B, hid)
    bias = (h @ params["w2"].astype(jnp.float32)
            + params["b2"].astype(jnp.float32))                        # (B, ctx_dim)

    # Precomposed base prompt [prefix | ctx | suffix] (parameters only).  The
    # kernel adds ONLY the per-batch bias on the ctx rows (no double count).
    base = jnp.concatenate(
        [prefix, jnp.broadcast_to(ctx[None], (n_cls, n_ctx, ctx_dim)), suffix],
        axis=1)                                                        # (n_cls, seq, ctx)

    if class_tile is None:
        class_tile = _pick_class_tile(n_cls, seq_len, ctx_dim,
                                      jnp.dtype(out_dtype).itemsize)
    class_tile = int(max(1, min(class_tile, n_cls)))
    num_class_tiles = pl.cdiv(n_cls, class_tile)    # edge tile masked by Pallas
    grid = (num_class_tiles, B)                     # class tiles outer, batch inner

    return pl.pallas_call(
        functools.partial(_prompt_kernel, n_ctx=n_ctx, prefix_len=prefix_len),
        out_shape=jax.ShapeDtypeStruct((B, n_cls, seq_len, ctx_dim), out_dtype),
        grid_spec=pltpu.PrefetchScalarGridSpec(
            num_scalar_prefetch=0,
            grid=grid,
            in_specs=[
                # tiny per-batch bias, constant index_map -> DMA'd once
                pl.BlockSpec((B, ctx_dim), lambda c, b: (0, 0)),
                # base prompt tile: resident across the B inner iterations
                pl.BlockSpec((class_tile, seq_len, ctx_dim),
                             lambda c, b: (c, 0, 0)),
            ],
            out_specs=pl.BlockSpec((1, class_tile, seq_len, ctx_dim),
                                   lambda c, b: (b, c, 0, 0)),
        ),
        compiler_params=pltpu.CompilerParams(
            dimension_semantics=("parallel", "arbitrary"),
            vmem_limit_bytes=vmem_limit_bytes,
        ),
    )(bias, base)


# ----------------------------- pure-JAX reference -----------------------------
def prompt_learner_ref(image_features, params):
    x = image_features.astype(jnp.float32).mean(axis=1)         # (B, vis_dim)
    h = jnp.maximum(x @ params["w1"] + params["b1"], 0.0)       # (B, hidden)
    bias = h @ params["w2"] + params["b2"]                      # (B, ctx_dim)
    ctx_shifted = params["ctx"][None, :, :] + bias[:, None, :]  # (B, n_ctx, D)
    n_cls = params["token_prefix"].shape[0]
    prompts = []
    for b in range(image_features.shape[0]):
        ctx_i = jnp.broadcast_to(ctx_shifted[b][None],
                                 (n_cls,) + ctx_shifted[b].shape)
        prompts.append(jnp.concatenate(
            [params["token_prefix"], ctx_i, params["token_suffix"]], axis=1))
    return jnp.stack(prompts)


if __name__ == "__main__":
    # Small, TPU-friendly synthetic shapes consistent with the module.
    B, T = 2, 8
    n_cls, n_ctx = 6, 4
    ctx_dim, vis_dim = 128, 128
    hidden = vis_dim // 16          # 8
    seq_len = 16                    # prefix(1) + n_ctx(4) + suffix(11)

    key = jax.random.PRNGKey(0)
    k = jax.random.split(key, 8)

    params = {
        "ctx": 0.02 * jax.random.normal(k[0], (n_ctx, ctx_dim), jnp.float32),
        "w1": 0.05 * jax.random.normal(k[1], (vis_dim, hidden), jnp.float32),
        "b1": 0.01 * jax.random.normal(k[2], (hidden,), jnp.float32),
        "w2": 0.05 * jax.random.normal(k[3], (hidden, ctx_dim), jnp.float32),
        "b2": 0.01 * jax.random.normal(k[4], (ctx_dim,), jnp.float32),
    }
    # Synthetic frozen token embedding -> prefix / suffix buffers.
    # TODO(synk): real CLIP tokenization + token_embedding lookup happens in
    # __init__, not forward; here prefix/suffix are synthetic buffers.
    embedding = 0.02 * jax.random.normal(
        k[5], (n_cls, seq_len, ctx_dim), jnp.float32)
    params["token_prefix"] = embedding[:, :1, :]
    params["token_suffix"] = embedding[:, 1 + n_ctx:, :]

    image_features = jax.random.normal(k[6], (B, T, vis_dim), jnp.float32)

    expected = prompt_learner_ref(image_features, params)

    # (1) default: auto class_tile (= ceil(6/2) = 3 -> grid (2, 2)), f32 output.
    prompts = jax.block_until_ready(
        prompt_learner_forward(image_features, params))
    assert prompts.shape == (B, n_cls, seq_len, ctx_dim), prompts.shape
    assert jnp.allclose(prompts, expected, atol=1e-5, rtol=1e-5), \
        "mismatch vs reference (default tile)"

    # (2) non-divisible class tiling: class_tile=4 over n_cls=6 ->
    #     grid = (cdiv(6,4)=2, 2); the last class tile overhangs and is masked.
    prompts2 = jax.block_until_ready(
        prompt_learner_forward(image_features, params, class_tile=4))
    assert jnp.allclose(prompts2, expected, atol=1e-5, rtol=1e-5), \
        "mismatch vs reference (non-divisible class_tile=4)"

    # (3) bf16 output path (the 2x HBM-write lever); loose tolerance vs f32 ref.
    prompts3 = jax.block_until_ready(
        prompt_learner_forward(image_features, params, out_dtype=jnp.bfloat16))
    assert prompts3.dtype == jnp.bfloat16
    assert jnp.allclose(prompts3.astype(jnp.float32), expected,
                        atol=1e-2, rtol=2e-2), \
        "mismatch vs reference (bf16 output)"

    print("KERNEL_OK")
</pallas_src>

<mosaic_0001>
module attributes {stable_mosaic.version = 11 : i64} {
  func.func @_prompt_kernel(%arg0: i32, %arg1: i32, %arg2: memref<2x128xf32, #tpu.memory_space<vmem>>, %arg3: memref<3x16x128xf32, #tpu.memory_space<vmem>>, %arg4: memref<1x3x16x128xf32, #tpu.memory_space<vmem>>) attributes {dimension_semantics = [#tpu.dimension_semantics<parallel>, #tpu.dimension_semantics<arbitrary>], iteration_bounds = array<i64: 2, 2>, scalar_prefetch = 0 : i64, scratch_operands = 0 : i64, tpu.core_type = #tpu.core_type<tc>, window_params = [{pipeline_mode = #tpu.pipeline_mode<synchronous>, transform_indices = @transform_0, window_bounds = array<i64: 2, 128>}, {transform_indices = @transform_1, window_bounds = array<i64: 3, 16, 128>}, {transform_indices = @transform_2, window_bounds = array<i64: 1, 3, 16, 128>}]} {
    %0 = arith.index_cast %arg1 : i32 to index
    %c0 = arith.constant 0 : index
    %1 = vector.load %arg2[%0, %c0] : memref<2x128xf32, #tpu.memory_space<vmem>>, vector<1x128xf32>
    %2 = tpu.iota {dimensions = array<i32: 0>} : vector<16x128xi32>
    %c1_i32 = arith.constant 1 : i32
    %3 = vector.broadcast %c1_i32 : i32 to vector<16x128xi32>
    %4 = arith.cmpi sge, %2, %3 : vector<16x128xi32>
    %c5_i32 = arith.constant 5 : i32
    %5 = vector.broadcast %c5_i32 : i32 to vector<16x128xi32>
    %6 = arith.cmpi slt, %2, %5 : vector<16x128xi32>
    %7 = arith.andi %4, %6 : vector<16x128xi1>
    %cst = arith.constant 0.000000e+00 : f32
    %8 = vector.shape_cast %1 : vector<1x128xf32> to vector<1x128xf32>
    %9 = vector.broadcast %8 : vector<1x128xf32> to vector<16x128xf32>
    %10 = vector.broadcast %cst : f32 to vector<16x128xf32>
    %11 = arith.select %7, %9, %10 : vector<16x128xi1>, vector<16x128xf32>
    %c0_0 = arith.constant 0 : index
    %c0_1 = arith.constant 0 : index
    %c0_2 = arith.constant 0 : index
    %12 = vector.load %arg3[%c0_0, %c0_1, %c0_2] : memref<3x16x128xf32, #tpu.memory_space<vmem>>, vector<3x16x128xf32>
    %13 = vector.shape_cast %11 : vector<16x128xf32> to vector<1x16x128xf32>
    %14 = vector.broadcast %13 : vector<1x16x128xf32> to vector<3x16x128xf32>
    %15 = arith.addf %12, %14 : vector<3x16x128xf32>
    %c0_3 = arith.constant 0 : index
    %c0_4 = arith.constant 0 : index
    %c0_5 = arith.constant 0 : index
    %c0_6 = arith.constant 0 : index
    %16 = vector.load %arg4[%c0_3, %c0_4, %c0_5, %c0_6] : memref<1x3x16x128xf32, #tpu.memory_space<vmem>>, vector<1x3x16x128xf32>
    %17 = vector.shape_cast %16 : vector<1x3x16x128xf32> to vector<3x16x128xf32>
    %18 = vector.shape_cast %15 : vector<3x16x128xf32> to vector<1x3x16x128xf32>
    tpu.vector_store %arg4[%c0_3, %c0_4, %c0_5, %c0_6], %18 {strides = array<i32>} : memref<1x3x16x128xf32, #tpu.memory_space<vmem>>, vector<1x3x16x128xf32>,
    return
  }
  func.func @transform_0(%arg0: i32, %arg1: i32) -> (i32, i32) {
    %c0_i32 = arith.constant 0 : i32
    %c0_i32_0 = arith.constant 0 : i32
    %c0_i32_1 = arith.constant 0 : i32
    return %c0_i32, %c0_i32_0 : i32, i32
  }
  func.func @transform_1(%arg0: i32, %arg1: i32) -> (i32, i32, i32) {
    %c0_i32 = arith.constant 0 : i32
    %c0_i32_0 = arith.constant 0 : i32
    %c0_i32_1 = arith.constant 0 : i32
    return %arg0, %c0_i32, %c0_i32_0 : i32, i32, i32
  }
  func.func @transform_2(%arg0: i32, %arg1: i32) -> (i32, i32, i32, i32) {
    %c0_i32 = arith.constant 0 : i32
    %c0_i32_0 = arith.constant 0 : i32
    %c0_i32_1 = arith.constant 0 : i32
    return %arg1, %arg0, %c0_i32, %c0_i32_0 : i32, i32, i32, i32
  }
}

</mosaic_0001>

<llo_original>
// kernel: tpu_custom_call.1
$region0: #{tpu_custom_call.1}
  #allocation0 [shape = 'u32[]', space=smem, size = 0x4, offset = 0x4, fixed_abs, tag = 'smem constant byte address 0x4 - core index']
  #allocation1 [shape = 'u32[144,128]{1,0:T(1,128)}', space=vmem, size = 0x12000, scoped, tag = 'internal scratch']
  %s0 = inlined_call_operand.hbm [shape: f32[2,128], index: 0, kind: input, shape index: {}]
  %s1 = inlined_call_operand.hbm [shape: f32[6,16,128], index: 1, kind: input, shape index: {}]
  %s2 = inlined_call_operand.hbm [shape: f32[2,6,16,128], index: 2, kind: output, shape index: {}]
  %s3 = sld [smem:[#allocation0]]
  $region49: #{tpu_custom_call.1} parent=0
    _
  %s5 = ssub.s32 1, %s3
  %s6 = scalar_select 0, %s5, %s3
  $region1: #{tpu_custom_call.1} parent=0
    #allocation2 [shape = 'u8[1024]{0}', space=vmem, size = 0x400, scoped, tag = 'input window, operand 0, single buffered']
    #allocation3 [shape = 's32[2]{0}', space=sflag, size = 0x8, scoped, tag = 'scoped memory for tpu_custom_call.1']
    #allocation4 [shape = 's32[2]{0}', space=sflag, size = 0x8, scoped, tag = 'scoped memory for tpu_custom_call.1']
    #allocation5 [shape = 'u8[49152]{0}', space=vmem, size = 0xc000, scoped, tag = 'input window, operand 1']
    #allocation6 [shape = 's32[2]{0}', space=sflag, size = 0x8, scoped, tag = 'scoped memory for tpu_custom_call.1']
    #allocation7 [shape = 'u8[49152]{0}', space=vmem, size = 0xc000, scoped, tag = 'output window, operand 0']
    %7 = vsyncpa [#allocation3], 0
    %8 = vsyncpa [#allocation6], 0
    %s9 = scalar_lea.sflag [#allocation6], 1
    %10 = vsyncpa %s9, 0
    %11 = vsyncpa [#allocation4], 0
    %s12 = scalar_lea.sflag [#allocation4], 1
    %13 = vsyncpa %s12, 0
    loop: start=0, step=1, limit=6
    $region2: #{tpu_custom_call.1} parent=1 // loop_pre_header
      _
    $region3: #{tpu_custom_call.1} parent=1 // loop_header
      %s15 = sphi 0, %s19
      %p16 = scmp.ge.s32.totalorder %s15, 6
      %s22 = sphi 0, %s34
      %s23 = sphi 0, %s30
      %s24 = sphi 0, %s22
      %s25 = sphi 0, %s23
      %s26 = sphi 0, %s24
      %s27 = sphi 0, %s25
      %s35 = sphi 0, %s35
      %s37 = sphi 0, %s35
      %s38 = sphi 0, %s37
      %s52 = sphi 0, %s38
      %s58 = sphi 0, %s60
      %s61 = sphi 0, %s58
      %s62 = sphi 0, %s61
      %s78 = sphi 0, %s62
      %s86 = sphi 0, %s88
      %s89 = sphi 0, %s86
      %s90 = sphi 0, %s89
      %s106 = sphi 0, %s90
    $region4: #{tpu_custom_call.1} parent=1 // loop_header_branch
      %18 = sbr.rel (%p16) target = $region8
    $region5: #{tpu_custom_call.1} parent=1 // loop_body
      %s20 = ssub.s32 %s15, 1
      %s21 = ssub.s32 %s15, 2
      %s28 = sadd.s32 1, %s23
      %p29 = scmp.ge.s32.totalorder %s28, 2
      %s30 = scalar_select %p29, 0, %s28
      %s31 = sadd.s32 1, %s22
      %s32 = scalar_select %p29, %s31, %s22
      %p33 = scmp.ge.s32.totalorder %s32, 2
      %s34 = scalar_select %p33, 0, %s32
      %s36 = sadd.s32 %s35, 1
      %p39 = scmp.eq.s32.totalorder %s15, 3
      %p40 = scmp.ne.s32.totalorder %s35, %s37
      %p41 = scmp.eq.s32.totalorder %s15, 0
      %p42 = por %p40, %p41
      %p43 = scmp.ne.s32.totalorder %s35, %s37
      %p44 = scmp.eq.s32.totalorder %s20, 3
      %p45 = por %p43, %p44
      %p46 = scmp.ne.s32.totalorder %s37, %s38
      %p47 = scmp.eq.s32.totalorder %s20, 0
      %p48 = por %p46, %p47
      %p49 = scmp.ne.s32.totalorder %s37, %s38
      %p50 = scmp.eq.s32.totalorder %s21, 3
      %p51 = por %p49, %p50
      %p53 = scmp.ne.s32.totalorder %s38, %s52
      %p54 = scmp.eq.s32.totalorder %s21, 0
      %p55 = por %p53, %p54
      %s56 = ssub.s32 %s22, %s34
      %p57 = scmp.eq.s32.totalorder %s56, 0
      %s59 = sadd.s32 %s58, 1
      %s60 = scalar_select %p57, %s58, %s59
      %p63 = pneg %p57
      %p64 = scmp.eq.s32.totalorder %s15, 3
      %p65 = por %p63, %p64
      %p66 = scmp.ne.s32.totalorder %s58, %s61
      %p67 = scmp.eq.s32.totalorder %s15, 0
      %p68 = por %p66, %p67
      %p69 = scmp.ne.s32.totalorder %s58, %s61
      %p70 = scmp.eq.s32.totalorder %s20, 3
      %p71 = por %p69, %p70
      %p72 = scmp.ne.s32.totalorder %s61, %s62
      %p73 = scmp.eq.s32.totalorder %s20, 0
      %p74 = por %p72, %p73
      %p75 = scmp.ne.s32.totalorder %s61, %s62
      %p76 = scmp.eq.s32.totalorder %s21, 3
      %p77 = por %p75, %p76
      %p79 = scmp.ne.s32.totalorder %s62, %s78
      %p80 = scmp.eq.s32.totalorder %s21, 0
      %p81 = por %p79, %p80
      %s82 = ssub.s32 %s23, %s30
      %s83 = ssub.s32 %s22, %s34
      %s84 = sor.u32 %s82, %s83
      %p85 = scmp.eq.s32.totalorder %s84, 0
      %s87 = sadd.s32 %s86, 1
      %s88 = scalar_select %p85, %s86, %s87
      %p91 = pneg %p85
      %p92 = scmp.eq.s32.totalorder %s15, 3
      %p93 = por %p91, %p92
      %p94 = scmp.ne.s32.totalorder %s86, %s89
      %p95 = scmp.eq.s32.totalorder %s15, 0
      %p96 = por %p94, %p95
      %p97 = scmp.ne.s32.totalorder %s86, %s89
      %p98 = scmp.eq.s32.totalorder %s20, 3
      %p99 = por %p97, %p98
      %p100 = scmp.ne.s32.totalorder %s89, %s90
      %p101 = scmp.eq.s32.totalorder %s20, 0
      %p102 = por %p100, %p101
      %p103 = scmp.ne.s32.totalorder %s89, %s90
      %p104 = scmp.eq.s32.totalorder %s21, 3
      %p105 = por %p103, %p104
      %p107 = scmp.ne.s32.totalorder %s90, %s106
      %p108 = scmp.eq.s32.totalorder %s21, 0
      %p109 = por %p107, %p108
      %p110 = scmp.le.s32.totalorder 1, %s15
      %p111 = scmp.lt.s32.totalorder %s15, 5
      %p112 = pnand %p110, %p111
      %p113 = pneg %p112
      // Predicated region
      $region9: #{tpu_custom_call.1} parent=5 // pred_check
        _
      $region10: #{tpu_custom_call.1} parent=5 // pred_check_branch
        %115 = sbr.rel (%p112) target = $region12
      $region11: #{tpu_custom_call.1} parent=5 // pred_region
        %s116 = ssub.s32 %s15, 1
        // Predicated region
        $region13: #{tpu_custom_call.1} parent=11 // pred_check
          %p117 = pneg %p48
        $region14: #{tpu_custom_call.1} parent=11 // pred_check_branch
          %119 = sbr.rel (%p117) target = $region16
        $region15: #{tpu_custom_call.1} parent=11 // pred_region
          %s121 = ssub.s32 32, 32
          %122 = vsyncadd [#allocation3], %s121
          %s124 = sshll.u32 [#allocation2], 4
          %s125 = int_to_ptr.vmem [resolvable:$true] %s124
          %127 = dma.hbm_to_vmem [thread:$0]  %s0, 32, %s125, [#allocation3]
        $region16: #{tpu_custom_call.1} parent=11 // pred_fallthru
          _
      $region12: #{tpu_custom_call.1} parent=5 // pred_fallthru
        _
      %p128 = scmp.lt.s32.totalorder %s15, 4
      // Predicated region
      $region17: #{tpu_custom_call.1} parent=5 // pred_check
        %p129 = pneg %p128
      $region18: #{tpu_custom_call.1} parent=5 // pred_check_branch
        %131 = sbr.rel (%p129) target = $region20
      $region19: #{tpu_custom_call.1} parent=5 // pred_region
        // Predicated region
        $region21: #{tpu_custom_call.1} parent=19 // pred_check
          %p132 = pneg %p68
        $region22: #{tpu_custom_call.1} parent=19 // pred_check_branch
          %134 = sbr.rel (%p132) target = $region24
        $region23: #{tpu_custom_call.1} parent=19 // pred_region
          %s135 = sand.u32 %s58, 1
          %s136 = scalar_lea.sflag [#allocation6], %s135
          %s137 = sand.u32 %s58, 1
          %s138 = smul.addr %s137, 48
          %s139 = scalar_lea.vmem [#allocation5], %s138
          %s140 = smul.u32 3, %s22
          %s142 = ssub.s32 768, 768
          %143 = vsyncadd %s136, %s142
          %s144 = smul.addr %s140, 2
          %s145 = smul.addr %s144, 128
          %s146 = scalar_lea.hbm %s1, %s145
          %s147 = sshll.u32 %s139, 4
          %s148 = int_to_ptr.vmem [resolvable:$true] %s147
          %153 = dma.hbm_to_vmem [thread:$0]  %s146, 768, %s148, %s136, 128, 128, 8
        $region24: #{tpu_custom_call.1} parent=19 // pred_fallthru
          _
      $region20: #{tpu_custom_call.1} parent=5 // pred_fallthru
        _
      %p154 = scmp.le.s32.totalorder 1, %s15
      %p155 = scmp.lt.s32.totalorder %s15, 5
      %p156 = pnand %p154, %p155
      %p157 = pneg %p156
      // Predicated region
      $region25: #{tpu_custom_call.1} parent=5 // pred_check
        _
      $region26: #{tpu_custom_call.1} parent=5 // pred_check_branch
        %159 = sbr.rel (%p156) target = $region28
      $region27: #{tpu_custom_call.1} parent=5 // pred_region
        %s160 = ssub.s32 %s15, 1
        // Predicated region
        $region29: #{tpu_custom_call.1} parent=27 // pred_check
          %p161 = pneg %p48
        $region30: #{tpu_custom_call.1} parent=27 // pred_check_branch
          %163 = sbr.rel (%p161) target = $region32
        $region31: #{tpu_custom_call.1} parent=27 // pred_region
          %164 = dma.done [#allocation3], 32
        $region32: #{tpu_custom_call.1} parent=27 // pred_fallthru
          _
        %s165 = sand.u32 %s61, 1
        %s166 = scalar_lea.sflag [#allocation6], %s165
        %s167 = sand.u32 %s61, 1
        %s168 = smul.addr %s167, 48
        %s169 = scalar_lea.vmem [#allocation5], %s168
        // Predicated region
        $region33: #{tpu_custom_call.1} parent=27 // pred_check
          %p170 = pneg %p74
        $region34: #{tpu_custom_call.1} parent=27 // pred_check_branch
          %172 = sbr.rel (%p170) target = $region36
        $region35: #{tpu_custom_call.1} parent=27 // pred_region
          %173 = dma.done %s166, 768
        $region36: #{tpu_custom_call.1} parent=27 // pred_fallthru
          _
        %p174 = pneg %p48
        %p175 = pneg %p45
        %s176 = sand.u32 %s61, 1
        %s177 = scalar_lea.sflag [#allocation6], %s176
        %s178 = sand.u32 %s61, 1
        %s179 = smul.addr %s178, 48
        %s180 = scalar_lea.vmem [#allocation5], %s179
        %p181 = pneg %p74
        %p182 = pneg %p71
        %p183 = pneg %p102
        %p184 = pneg %p99
        %s185 = sand.u32 %s89, 1
        %s186 = scalar_lea.sflag [#allocation4], %s185
        %s187 = sand.u32 %s89, 1
        %s188 = smul.addr %s187, 48
        %s189 = scalar_lea.vmem [#allocation7], %s188
        %s190 = smul.u32 3, %s24
        %s191 = smul.u32 3, %s24
        %s192 = scalar_lea.vmem [#allocation2], %s25
        %v193 = vld [vmem:[%s192] sm:$0x1]
        %v194 = vlaneseq
        %v195 = vshrl.u32 %v194, 7
        %v196 = vadd.s32 %v195, 8
        %vm197 = vcmp.ge.s32.totalorder %v195, 1
        %vm198 = vcmp.ge.s32.totalorder %v196, 1
        %vm199 = vcmp.lt.s32.totalorder %v195, 5
        %vm200 = vcmp.lt.s32.totalorder %v196, 5
        %vm201 = vmand %vm197, %vm199
        %vm202 = vmand %vm198, %vm200
        %v203 = vlaneseq
        %v204 = vshrl.u32 %v203, 7
        %v205 = vsub.s32 0, %v204
        %v206 = vrot.slane %v193, %v205
        %v207 = vsel %vm201, %v206, 0.0
        %v208 = vsel %vm202, %v206, 0.0
        %v209 = vld [vmem:[%s169] sm:$0xff]
        %v210 = vld [vmem:[%s169 + $0x8] sm:$0xff]
        %v211 = vld [vmem:[%s169 + $0x10] sm:$0xff]
        %v212 = vld [vmem:[%s169 + $0x18] sm:$0xff]
        %v213 = vld [vmem:[%s169 + $0x20] sm:$0xff]
        %v214 = vld [vmem:[%s169 + $0x28] sm:$0xff]
        %v215 = vadd.f32 %v209, %v207
        %v216 = vadd.f32 %v210, %v208
        %v217 = vadd.f32 %v211, %v207
        %v218 = vadd.f32 %v212, %v208
        %v219 = vadd.f32 %v213, %v207
        %v220 = vadd.f32 %v214, %v208
        %221 = vst [vmem:[%s189] sm:$0xff] %v215
        %222 = vst [vmem:[%s189 + $0x8] sm:$0xff] %v216
        %223 = vst [vmem:[%s189 + $0x10] sm:$0xff] %v217
        %224 = vst [vmem:[%s189 + $0x18] sm:$0xff] %v218
        %225 = vst [vmem:[%s189 + $0x20] sm:$0xff] %v219
        %226 = vst [vmem:[%s189 + $0x28] sm:$0xff] %v220
        %s227 = sand.u32 %s89, 1
        %s228 = scalar_lea.sflag [#allocation4], %s227
        %s229 = sand.u32 %s89, 1
        %s230 = smul.addr %s229, 48
        %s231 = scalar_lea.vmem [#allocation7], %s230
        // Predicated region
        $region37: #{tpu_custom_call.1} parent=27 // pred_check
          %p232 = pneg %p99
        $region38: #{tpu_custom_call.1} parent=27 // pred_check_branch
          %234 = sbr.rel (%p232) target = $region40
        $region39: #{tpu_custom_call.1} parent=27 // pred_region
          %s235 = smul.u32 3, %s24
          %s237 = ssub.s32 768, 768
          %238 = vsyncadd %s228, %s237
          %s239 = smul.addr %s235, 2
          %s240 = smul.addr %s25, 12
          %s241 = sadd.s32 %s239, %s240
          %s242 = smul.addr %s241, 128
          %s243 = scalar_lea.hbm %s2, %s242
          %s244 = sshll.u32 %s231, 4
          %s245 = int_to_ptr.vmem [resolvable:$true] %s244
          %250 = dma.vmem_to_hbm [thread:$0]  %s245, 768, %s243, %s228, 128, 128, 8
        $region40: #{tpu_custom_call.1} parent=27 // pred_fallthru
          _
      $region28: #{tpu_custom_call.1} parent=5 // pred_fallthru
        _
      %p251 = scmp.le.s32.totalorder 2, %s15
      // Predicated region
      $region41: #{tpu_custom_call.1} parent=5 // pred_check
        %p252 = pneg %p251
      $region42: #{tpu_custom_call.1} parent=5 // pred_check_branch
        %254 = sbr.rel (%p252) target = $region44
      $region43: #{tpu_custom_call.1} parent=5 // pred_region
        %s255 = ssub.s32 %s15, 2
        // Predicated region
        $region45: #{tpu_custom_call.1} parent=43 // pred_check
          %p256 = pneg %p105
        $region46: #{tpu_custom_call.1} parent=43 // pred_check_branch
          %258 = sbr.rel (%p256) target = $region48
        $region47: #{tpu_custom_call.1} parent=43 // pred_region
          %s259 = sand.u32 %s90, 1
          %s260 = scalar_lea.sflag [#allocation4], %s259
          %s261 = sand.u32 %s90, 1
          %s262 = smul.addr %s261, 48
          %s263 = scalar_lea.vmem [#allocation7], %s262
          %264 = dma.done %s260, 768
        $region48: #{tpu_custom_call.1} parent=43 // pred_fallthru
          _
      $region44: #{tpu_custom_call.1} parent=5 // pred_fallthru
        _
    $region6: #{tpu_custom_call.1} parent=1 // loop_footer
      %s19 = sadd.s32 1, %s15
    $region7: #{tpu_custom_call.1} parent=1 // loop_footer_branch
      %14 = sbr.rel target = $region3
    $region8: #{tpu_custom_call.1} parent=1 // loop_exit
      _
    %265 = vsyncpa [#allocation3], 1
    %s266 = scalar_lea.sflag [#allocation3], 1
    %267 = vsyncpa %s266, 1
    %268 = vsyncpa [#allocation6], 1
    %s269 = scalar_lea.sflag [#allocation6], 1
    %270 = vsyncpa %s269, 1
    %271 = vsyncpa [#allocation4], 1
    %s272 = scalar_lea.sflag [#allocation4], 1
    %273 = vsyncpa %s272, 1

</llo_original>
